<compile_context>
chip_gen: v7x
topology: tpu7x:2x2x1
jax: 0.10.0
libtpu: 0.0.40
codegen_flags: <defaults>
</compile_context>

<pallas_src>
import functools

import jax
import jax.numpy as jnp
from jax import lax
from jax.experimental import pallas as pl
from jax.experimental.pallas import tpu as pltpu


def _round_up(x, m):
    return ((x + m - 1) // m) * m


def _qnetwork_kernel(x_ref, w1_ref, b1_ref, w2_ref, b2_ref, w3_ref, b3_ref,
                     out_ref, *, sub_rows, num_chunks):
    """Fused MLP on one batch tile, processed in `sub_rows`-row chunks.

    Chunking bounds the live range of the f32 h1/h2 intermediates so large
    batch tiles do not spill vregs. The MXU is fed bf16 (or f32) operands with
    f32 accumulation via preferred_element_type; biases are added in f32.
    """
    # Weights/biases are VMEM-resident (constant index_map); load once.
    w1 = w1_ref[...]
    w2 = w2_ref[...]
    w3 = w3_ref[...]
    b1 = b1_ref[...]
    b2 = b2_ref[...]
    b3 = b3_ref[...]

    # TODO(synk): on v6e/v7x the K=8 first layer could run on the VPU as 8
    # broadcasted FMAs to shave ~1/3 of the MXU pushes; kept on the MXU here.
    def chunk(c, carry):
        r0 = pl.multiple_of(c * sub_rows, sub_rows)
        x = x_ref[pl.ds(r0, sub_rows), :].astype(w1.dtype)
        # layer1 + ReLU (MXU matmul, f32 accumulation)
        h1 = jnp.dot(x, w1, preferred_element_type=jnp.float32)
        h1 = jnp.maximum(h1 + b1, 0.0)
        # layer2 + ReLU
        h2 = jnp.dot(h1.astype(w2.dtype), w2, preferred_element_type=jnp.float32)
        h2 = jnp.maximum(h2 + b2, 0.0)
        # layer3 (no activation), unpadded store
        out = jnp.dot(h2.astype(w3.dtype), w3, preferred_element_type=jnp.float32)
        out_ref[pl.ds(r0, sub_rows), :] = (out + b3).astype(out_ref.dtype)
        return carry

    lax.fori_loop(0, num_chunks, chunk, 0, unroll=True)


@functools.partial(jax.jit, static_argnames=("block_b", "compute_dtype"))
def qnetwork_forward(state, w1, b1, w2, b2, w3, b3, *, block_b=2048,
                     compute_dtype=jnp.bfloat16):
    """Fused QNetwork forward pass as one batch-tiled pallas_call.

    state: (B, S) f32
    w1: (S, H1), b1: (1, H1)
    w2: (H1, H2), b2: (1, H2)
    w3: (H2, A), b3: (1, A)
    returns: (B, A) f32
    """
    B, S = state.shape
    H1 = w1.shape[1]
    H2 = w2.shape[1]
    A = w3.shape[1]

    # MXU feed dtype: bf16 by default (f32 matmul is multi-pass on the MXU).
    # Biases stay f32; activations are cast inside the kernel (no extra HBM
    # pass over `state` in the wrapper).
    if compute_dtype != jnp.float32:
        w1c = w1.astype(compute_dtype)
        w2c = w2.astype(compute_dtype)
        w3c = w3.astype(compute_dtype)
    else:
        w1c, w2c, w3c = w1, w2, w3

    # Batch tile. The x/out VMEM tiles are f32 (the bf16 cast lives in vregs),
    # so the sublane granule is 8. No padding of `state`: the grid is
    # ceil(B / TB) and the ragged last block is safe because rows are fully
    # independent and out-of-bounds output rows are dropped on writeback.
    TB = min(int(block_b), _round_up(B, 8))
    if B > 8:
        # v7x: keep at least 2 grid steps so ("parallel",) can feed both TCs.
        TB = min(TB, _round_up(-(-B // 2), 8))
    TB = max(8, (TB // 8) * 8)
    if TB > 512:
        TB = (TB // 512) * 512      # 512-row sub-chunks divide the tile evenly
        sub_rows = 512
    else:
        sub_rows = TB
    num_chunks = TB // sub_rows
    grid = (pl.cdiv(B, TB),)

    # Weights/biases map to block (0, 0) on every grid step -> VMEM-resident.
    in_specs = [
        pl.BlockSpec((TB, S), lambda i: (i, 0)),   # x: tiled over batch
        pl.BlockSpec((S, H1), lambda i: (0, 0)),
        pl.BlockSpec((1, H1), lambda i: (0, 0)),
        pl.BlockSpec((H1, H2), lambda i: (0, 0)),
        pl.BlockSpec((1, H2), lambda i: (0, 0)),
        pl.BlockSpec((H2, A), lambda i: (0, 0)),
        pl.BlockSpec((1, A), lambda i: (0, 0)),
    ]
    # Unpadded output: last dim A equals the full array dim (satisfies the
    # (8,128) rule), so nothing is wasted on dead lanes and no slice follows.
    out_specs = pl.BlockSpec((TB, A), lambda i: (i, 0))

    flops = 2 * B * (S * H1 + H1 * H2 + H2 * A)
    w_bytes = (w1c.dtype.itemsize * (S * H1 + H1 * H2 + H2 * A)
               + 4 * (H1 + H2 + A))
    bytes_accessed = 4 * B * S + 4 * B * A + w_bytes
    cost = pl.CostEstimate(flops=flops, transcendentals=0,
                           bytes_accessed=bytes_accessed)

    kernel = functools.partial(_qnetwork_kernel, sub_rows=sub_rows,
                               num_chunks=num_chunks)

    return pl.pallas_call(
        kernel,
        out_shape=jax.ShapeDtypeStruct((B, A), jnp.float32),
        grid=grid,
        in_specs=in_specs,
        out_specs=out_specs,
        compiler_params=pltpu.CompilerParams(
            dimension_semantics=("parallel",),       # batch axis -> both v7x TCs
            vmem_limit_bytes=4 * 1024 * 1024,        # actual use is well < 1 MiB
        ),
        cost_estimate=cost,
    )(state, w1c, b1, w2c, b2, w3c, b3)


def init_qnetwork_params(key, state_space, action_space,
                         hidden_layer1=64, hidden_layer2=64):
    """Deterministic init mimicking PyTorch nn.Linear default:
    U(-1/sqrt(fan_in), 1/sqrt(fan_in)) for both weight and bias."""
    keys = jax.random.split(key, 6)

    def linear(kw, kb, fan_in, fan_out):
        bound = 1.0 / jnp.sqrt(jnp.float32(fan_in))
        w = jax.random.uniform(kw, (fan_in, fan_out), jnp.float32, -bound, bound)
        b = jax.random.uniform(kb, (1, fan_out), jnp.float32, -bound, bound)
        return w, b

    w1, b1 = linear(keys[0], keys[1], state_space, hidden_layer1)
    w2, b2 = linear(keys[2], keys[3], hidden_layer1, hidden_layer2)
    w3, b3 = linear(keys[4], keys[5], hidden_layer2, action_space)
    return (w1, b1, w2, b2, w3, b3)


def _reference(x, params, feed_dtype):
    """Pure-JAX reference with the same MXU-feed rounding as the kernel:
    operands cast to feed_dtype, products/sums accumulated in f32, f32 biases."""
    w1, b1, w2, b2, w3, b3 = params

    def feed(a):
        return a.astype(feed_dtype).astype(jnp.float32)

    h = jnp.maximum(feed(x) @ feed(w1) + b1, 0.0)
    h = jnp.maximum(feed(h) @ feed(w2) + b2, 0.0)
    return feed(h) @ feed(w3) + b3


if __name__ == "__main__":
    # Small shapes consistent with the module: state_space=8, action_space=4,
    # hidden layers = 64, batch = 8.
    B, STATE_SPACE, ACTION_SPACE = 8, 8, 4
    H1 = H2 = 64

    key = jax.random.PRNGKey(0)
    pkey, xkey = jax.random.split(key)
    params = init_qnetwork_params(pkey, STATE_SPACE, ACTION_SPACE, H1, H2)
    state = jax.random.normal(xkey, (B, STATE_SPACE), jnp.float32)

    # Default path: bf16 MXU feeds, f32 accumulation.
    out = jax.block_until_ready(qnetwork_forward(state, *params))
    ref_bf16 = _reference(state, params, jnp.bfloat16)
    assert out.shape == (B, ACTION_SPACE)
    assert jnp.allclose(out, ref_bf16, atol=1e-2, rtol=1e-2), "bf16 mismatch"

    # Opt-in f32 path matches the exact PyTorch-equivalent math tightly.
    out_f32 = jax.block_until_ready(
        qnetwork_forward(state, *params, compute_dtype=jnp.float32))
    ref_f32 = _reference(state, params, jnp.float32)
    assert jnp.allclose(out_f32, ref_f32, atol=1e-5, rtol=1e-5), "f32 mismatch"

    # Exercise a non-trivial grid with a ragged last block (B not a multiple
    # of the tile) and the v7x >=2-grid-step cap.
    B2 = 300
    state2 = jax.random.normal(jax.random.PRNGKey(1), (B2, STATE_SPACE),
                               jnp.float32)
    out2 = jax.block_until_ready(
        qnetwork_forward(state2, *params, block_b=128))
    ref2 = _reference(state2, params, jnp.bfloat16)
    assert out2.shape == (B2, ACTION_SPACE)
    assert jnp.allclose(out2, ref2, atol=1e-2, rtol=1e-2), "tiled mismatch"

    print("KERNEL_OK")
</pallas_src>

<mosaic_0001>
module attributes {stable_mosaic.version = 11 : i64} {
  func.func @_qnetwork_kernel(%arg0: i32, %arg1: memref<8x8xf32, #tpu.memory_space<vmem>>, %arg2: memref<8x64xbf16, #tpu.memory_space<vmem>>, %arg3: memref<1x64xf32, #tpu.memory_space<vmem>>, %arg4: memref<64x64xbf16, #tpu.memory_space<vmem>>, %arg5: memref<1x64xf32, #tpu.memory_space<vmem>>, %arg6: memref<64x4xbf16, #tpu.memory_space<vmem>>, %arg7: memref<1x4xf32, #tpu.memory_space<vmem>>, %arg8: memref<8x4xf32, #tpu.memory_space<vmem>>) attributes {dimension_semantics = [#tpu.dimension_semantics<parallel>], iteration_bounds = array<i64: 1>, scalar_prefetch = 0 : i64, scratch_operands = 0 : i64, tpu.core_type = #tpu.core_type<tc>, window_params = [{transform_indices = @transform_0, window_bounds = array<i64: 8, 8>}, {pipeline_mode = #tpu.pipeline_mode<synchronous>, transform_indices = @transform_1, window_bounds = array<i64: 8, 64>}, {pipeline_mode = #tpu.pipeline_mode<synchronous>, transform_indices = @transform_2, window_bounds = array<i64: 1, 64>}, {pipeline_mode = #tpu.pipeline_mode<synchronous>, transform_indices = @transform_3, window_bounds = array<i64: 64, 64>}, {pipeline_mode = #tpu.pipeline_mode<synchronous>, transform_indices = @transform_4, window_bounds = array<i64: 1, 64>}, {pipeline_mode = #tpu.pipeline_mode<synchronous>, transform_indices = @transform_5, window_bounds = array<i64: 64, 4>}, {pipeline_mode = #tpu.pipeline_mode<synchronous>, transform_indices = @transform_6, window_bounds = array<i64: 1, 4>}, {transform_indices = @transform_7, window_bounds = array<i64: 8, 4>}]} {
    %c0 = arith.constant 0 : index
    %c0_0 = arith.constant 0 : index
    %0 = vector.load %arg2[%c0, %c0_0] : memref<8x64xbf16, #tpu.memory_space<vmem>>, vector<8x64xbf16>
    %c0_1 = arith.constant 0 : index
    %c0_2 = arith.constant 0 : index
    %1 = vector.load %arg4[%c0_1, %c0_2] : memref<64x64xbf16, #tpu.memory_space<vmem>>, vector<64x64xbf16>
    %c0_3 = arith.constant 0 : index
    %c0_4 = arith.constant 0 : index
    %2 = vector.load %arg6[%c0_3, %c0_4] : memref<64x4xbf16, #tpu.memory_space<vmem>>, vector<64x4xbf16>
    %c0_5 = arith.constant 0 : index
    %c0_6 = arith.constant 0 : index
    %3 = vector.load %arg3[%c0_5, %c0_6] : memref<1x64xf32, #tpu.memory_space<vmem>>, vector<1x64xf32>
    %c0_7 = arith.constant 0 : index
    %c0_8 = arith.constant 0 : index
    %4 = vector.load %arg5[%c0_7, %c0_8] : memref<1x64xf32, #tpu.memory_space<vmem>>, vector<1x64xf32>
    %c0_9 = arith.constant 0 : index
    %c0_10 = arith.constant 0 : index
    %5 = vector.load %arg7[%c0_9, %c0_10] : memref<1x4xf32, #tpu.memory_space<vmem>>, vector<1x4xf32>
    %c0_i32 = arith.constant 0 : i32
    %c8_i32 = arith.constant 8 : i32
    %6 = arith.muli %c0_i32, %c8_i32 : i32
    %7 = tpu.assume_multiple %6, 8 : i32
    %8 = arith.index_cast %7 : i32 to index
    %c0_11 = arith.constant 0 : index
    %9 = vector.load %arg1[%8, %c0_11] : memref<8x8xf32, #tpu.memory_space<vmem>>, vector<8x8xf32>
    %10 = arith.truncf %9 : vector<8x8xf32> to vector<8x8xbf16>
    %cst = arith.constant dense<0.000000e+00> : vector<8x64xf32>
    %11 = tpu.matmul %10, %0, %cst {dimension_numbers = #tpu.dot_dimension_numbers<[1], [0], [0], [1], [0, 0, 1, 1], [], []>} : vector<8x8xbf16>, vector<8x64xbf16>, vector<8x64xf32> -> vector<8x64xf32>
    %12 = vector.broadcast %3 : vector<1x64xf32> to vector<8x64xf32>
    %13 = arith.addf %11, %12 : vector<8x64xf32>
    %cst_12 = arith.constant 0.000000e+00 : f32
    %14 = vector.broadcast %cst_12 : f32 to vector<8x64xf32>
    %15 = arith.maximumf %13, %14 : vector<8x64xf32>
    %16 = arith.truncf %15 : vector<8x64xf32> to vector<8x64xbf16>
    %cst_13 = arith.constant dense<0.000000e+00> : vector<8x64xf32>
    %17 = tpu.matmul %16, %1, %cst_13 {dimension_numbers = #tpu.dot_dimension_numbers<[1], [0], [0], [1], [0, 0, 1, 1], [], []>} : vector<8x64xbf16>, vector<64x64xbf16>, vector<8x64xf32> -> vector<8x64xf32>
    %18 = vector.broadcast %4 : vector<1x64xf32> to vector<8x64xf32>
    %19 = arith.addf %17, %18 : vector<8x64xf32>
    %cst_14 = arith.constant 0.000000e+00 : f32
    %20 = vector.broadcast %cst_14 : f32 to vector<8x64xf32>
    %21 = arith.maximumf %19, %20 : vector<8x64xf32>
    %22 = arith.truncf %21 : vector<8x64xf32> to vector<8x64xbf16>
    %cst_15 = arith.constant dense<0.000000e+00> : vector<8x4xf32>
    %23 = tpu.matmul %22, %2, %cst_15 {dimension_numbers = #tpu.dot_dimension_numbers<[1], [0], [0], [1], [0, 0, 1, 1], [], []>} : vector<8x64xbf16>, vector<64x4xbf16>, vector<8x4xf32> -> vector<8x4xf32>
    %24 = vector.broadcast %5 : vector<1x4xf32> to vector<8x4xf32>
    %25 = arith.addf %23, %24 : vector<8x4xf32>
    %26 = arith.index_cast %7 : i32 to index
    %c0_16 = arith.constant 0 : index
    %27 = vector.load %arg8[%26, %c0_16] : memref<8x4xf32, #tpu.memory_space<vmem>>, vector<8x4xf32>
    tpu.vector_store %arg8[%26, %c0_16], %25 {strides = array<i32>} : memref<8x4xf32, #tpu.memory_space<vmem>>, vector<8x4xf32>,
    %c1_i32 = arith.constant 1 : i32
    return
  }
  func.func @transform_0(%arg0: i32) -> (i32, i32) {
    %c0_i32 = arith.constant 0 : i32
    %c0_i32_0 = arith.constant 0 : i32
    return %arg0, %c0_i32 : i32, i32
  }
  func.func @transform_1(%arg0: i32) -> (i32, i32) {
    %c0_i32 = arith.constant 0 : i32
    %c0_i32_0 = arith.constant 0 : i32
    %c0_i32_1 = arith.constant 0 : i32
    return %c0_i32, %c0_i32_0 : i32, i32
  }
  func.func @transform_2(%arg0: i32) -> (i32, i32) {
    %c0_i32 = arith.constant 0 : i32
    %c0_i32_0 = arith.constant 0 : i32
    %c0_i32_1 = arith.constant 0 : i32
    return %c0_i32, %c0_i32_0 : i32, i32
  }
  func.func @transform_3(%arg0: i32) -> (i32, i32) {
    %c0_i32 = arith.constant 0 : i32
    %c0_i32_0 = arith.constant 0 : i32
    %c0_i32_1 = arith.constant 0 : i32
    return %c0_i32, %c0_i32_0 : i32, i32
  }
  func.func @transform_4(%arg0: i32) -> (i32, i32) {
    %c0_i32 = arith.constant 0 : i32
    %c0_i32_0 = arith.constant 0 : i32
    %c0_i32_1 = arith.constant 0 : i32
    return %c0_i32, %c0_i32_0 : i32, i32
  }
  func.func @transform_5(%arg0: i32) -> (i32, i32) {
    %c0_i32 = arith.constant 0 : i32
    %c0_i32_0 = arith.constant 0 : i32
    %c0_i32_1 = arith.constant 0 : i32
    return %c0_i32, %c0_i32_0 : i32, i32
  }
  func.func @transform_6(%arg0: i32) -> (i32, i32) {
    %c0_i32 = arith.constant 0 : i32
    %c0_i32_0 = arith.constant 0 : i32
    %c0_i32_1 = arith.constant 0 : i32
    return %c0_i32, %c0_i32_0 : i32, i32
  }
  func.func @transform_7(%arg0: i32) -> (i32, i32) {
    %c0_i32 = arith.constant 0 : i32
    %c0_i32_0 = arith.constant 0 : i32
    return %arg0, %c0_i32 : i32, i32
  }
}

</mosaic_0001>

<llo_original>
// kernel: qnetwork_forward.1
$region0: #{qnetwork_forward.1}
  #allocation0 [shape = 'u32[]', space=smem, size = 0x4, offset = 0x4, fixed_abs, tag = 'smem constant byte address 0x4 - core index']
  #allocation1 [shape = 'u32[144,128]{1,0:T(1,128)}', space=vmem, size = 0x12000, scoped, tag = 'internal scratch']
  %s0 = inlined_call_operand.vmem [shape: f32[8,8], index: 0, kind: input, shape index: {}]
  %s1 = inlined_call_operand.vmem [shape: bf16[8,64], index: 1, kind: input, shape index: {}]
  %s2 = inlined_call_operand.vmem [shape: f32[1,64], index: 2, kind: input, shape index: {}]
  %s3 = inlined_call_operand.vmem [shape: bf16[64,64], index: 3, kind: input, shape index: {}]
  %s4 = inlined_call_operand.vmem [shape: f32[1,64], index: 4, kind: input, shape index: {}]
  %s5 = inlined_call_operand.vmem [shape: bf16[64,4], index: 5, kind: input, shape index: {}]
  %s6 = inlined_call_operand.vmem [shape: f32[1,4], index: 6, kind: input, shape index: {}]
  %s7 = inlined_call_operand.vmem [shape: f32[8,4], index: 7, kind: output, shape index: {}]
  %s8 = sld [smem:[#allocation0]]
  $region38: #{qnetwork_forward.1} parent=0
    _
  %s10 = ssub.s32 1, %s8
  %s11 = scalar_select 0, %s10, %s8
  // Predicated region
  $region2: #{qnetwork_forward.1} parent=0 // pred_check
    _
  $region3: #{qnetwork_forward.1} parent=0 // pred_check_branch
    %13 = sbr.rel (0) target = $region5
  $region4: #{qnetwork_forward.1} parent=0 // pred_region
    _
  $region5: #{qnetwork_forward.1} parent=0 // pred_fallthru
    _
  // Predicated region
  $region6: #{qnetwork_forward.1} parent=0 // pred_check
    _
  $region7: #{qnetwork_forward.1} parent=0 // pred_check_branch
    %15 = sbr.rel (0) target = $region9
  $region8: #{qnetwork_forward.1} parent=0 // pred_region
    _
  $region9: #{qnetwork_forward.1} parent=0 // pred_fallthru
    _
  // Predicated region
  $region10: #{qnetwork_forward.1} parent=0 // pred_check
    _
  $region11: #{qnetwork_forward.1} parent=0 // pred_check_branch
    %17 = sbr.rel (0) target = $region13
  $region12: #{qnetwork_forward.1} parent=0 // pred_region
    _
  $region13: #{qnetwork_forward.1} parent=0 // pred_fallthru
    _
  // Predicated region
  $region14: #{qnetwork_forward.1} parent=0 // pred_check
    _
  $region15: #{qnetwork_forward.1} parent=0 // pred_check_branch
    %19 = sbr.rel (0) target = $region17
  $region16: #{qnetwork_forward.1} parent=0 // pred_region
    _
  $region17: #{qnetwork_forward.1} parent=0 // pred_fallthru
    _
  // Predicated region
  $region18: #{qnetwork_forward.1} parent=0 // pred_check
    _
  $region19: #{qnetwork_forward.1} parent=0 // pred_check_branch
    %21 = sbr.rel (0) target = $region21
  $region20: #{qnetwork_forward.1} parent=0 // pred_region
    _
  $region21: #{qnetwork_forward.1} parent=0 // pred_fallthru
    _
  // Predicated region
  $region22: #{qnetwork_forward.1} parent=0 // pred_check
    _
  $region23: #{qnetwork_forward.1} parent=0 // pred_check_branch
    %23 = sbr.rel (0) target = $region25
  $region24: #{qnetwork_forward.1} parent=0 // pred_region
    _
  $region25: #{qnetwork_forward.1} parent=0 // pred_fallthru
    _
  // Predicated region
  $region26: #{qnetwork_forward.1} parent=0 // pred_check
    _
  $region27: #{qnetwork_forward.1} parent=0 // pred_check_branch
    %25 = sbr.rel (0) target = $region29
  $region28: #{qnetwork_forward.1} parent=0 // pred_region
    _
  $region29: #{qnetwork_forward.1} parent=0 // pred_fallthru
    _
  %v27 = vld [vmem:[%s1] sm:$0xf]
  %v28 = vld [vmem:[%s3] sm:$0xf]
  %v29 = vld [vmem:[%s3 + $0x4] sm:$0xf]
  %v30 = vld [vmem:[%s3 + $0x8] sm:$0xf]
  %v31 = vld [vmem:[%s3 + $0xc] sm:$0xf]
  %v32 = vld [vmem:[%s3 + $0x10] sm:$0xf]
  %v33 = vld [vmem:[%s3 + $0x14] sm:$0xf]
  %v34 = vld [vmem:[%s3 + $0x18] sm:$0xf]
  %v35 = vld [vmem:[%s3 + $0x1c] sm:$0xf]
  %v36 = vld [vmem:[%s5] sm:$0xf]
  %v37 = vld [vmem:[%s5 + $0x4] sm:$0xf]
  %v38 = vld [vmem:[%s5 + $0x8] sm:$0xf]
  %v39 = vld [vmem:[%s5 + $0xc] sm:$0xf]
  %v40 = vld [vmem:[%s5 + $0x10] sm:$0xf]
  %v41 = vld [vmem:[%s5 + $0x14] sm:$0xf]
  %v42 = vld [vmem:[%s5 + $0x18] sm:$0xf]
  %v43 = vld [vmem:[%s5 + $0x1c] sm:$0xf]
  %v44 = vld [vmem:[%s2] sm:$0x1]
  %v45 = vld [vmem:[%s4] sm:$0x1]
  %v46 = vld [vmem:[%s6] sm:$0x1]
  %v47 = vld [vmem:[%s0] sm:$0xff]
  %v48 = vpack.c.bf16 %v47, %v47
  %v50 = vlaneseq
  %v51 = vshrl.u32 %v50, 7
  %v52 = vsub.s32 0, %v51
  %v53 = vrot.slane %v44, %v52
  %vm55 = vcmask 64512
  %v57 = vsel %vm55, %v48, 0
  %vm59 = vcmask 1043456
  %v61 = vsel %vm59, %v27, 0
  %63 = vmatprep.subr.bf16.mxu0 0
  %64 = vmatpush1.bf16.msra.mxu0 %v61
  %65 = vmatprep.subr.bf16.mxu0 0
  %66 = vmatpush1.bf16.msra.mxu0 0
  %67 = vmatprep.subr.bf16.mxu0 0
  %68 = vmatpush1.bf16.msra.mxu0 0
  %69 = vmatprep.subr.bf16.mxu0 0
  %70 = vmatpush1.bf16.msra.mxu0 0
  %71 = vmatprep.subr.bf16.mxu0 0
  %72 = vmatpush1.bf16.msra.mxu0 0
  %73 = vmatprep.subr.bf16.mxu0 0
  %74 = vmatpush1.bf16.msra.mxu0 0
  %75 = vmatprep.subr.bf16.mxu0 0
  %76 = vmatpush1.bf16.msra.mxu0 0
  %77 = vmatprep.subr.bf16.mxu0 0
  %78 = vmatpush1.bf16.msra.mxu0 0
  %79 = vmatprep.subr.bf16.mxu0 0
  %80 = vmatpush1.bf16.msra.mxu0 0
  %81 = vmatprep.subr.bf16.mxu0 0
  %82 = vmatpush1.bf16.msra.mxu0 0
  %83 = vmatprep.subr.bf16.mxu0 0
  %84 = vmatpush1.bf16.msra.mxu0 0
  %85 = vmatprep.subr.bf16.mxu0 0
  %86 = vmatpush1.bf16.msra.mxu0 0
  %87 = vmatprep.subr.bf16.mxu0 0
  %88 = vmatpush1.bf16.msra.mxu0 0
  %89 = vmatprep.subr.bf16.mxu0 0
  %90 = vmatpush1.bf16.msra.mxu0 0
  %91 = vmatprep.subr.bf16.mxu0 0
  %92 = vmatpush1.bf16.msra.mxu0 0
  %93 = vmatprep.subr.bf16.mxu0 0
  %94 = vmatpush1.bf16.msra.mxu0 0
  %95 = vmatprep.mubr.bf16.mxu0 0
  %96 = vmatmul.mubr.bf16.gmra.mrb[0].mxu0 %v57
  %v97 = vpop.f32.mrb[0].mxu0
  %v98 = vadd.f32 %v53, %v97
  %v99 = vpop.f32.mrb[0].mxu0
  %v100 = vpop.f32.mrb[0].mxu0
  %v101 = vpop.f32.mrb[0].mxu0
  %102 = vdwg.mxu0
  %v103 = vmax.f32 %v98, 0.0
  %v104 = vpack.c.bf16 %v103, %v103
  %v106 = vlaneseq
  %v107 = vshrl.u32 %v106, 7
  %v108 = vsub.s32 0, %v107
  %v109 = vrot.slane %v45, %v108
  %v119 = vunpack.c.l.b16 %v28
  %v120 = vunpack.c.l.b16 %v29
  %v121 = vunpack.c.l.b16 %v30
  %v122 = vunpack.c.l.b16 %v31
  %v123 = vunpack.c.l.b16 %v32
  %v124 = vunpack.c.l.b16 %v33
  %v125 = vunpack.c.l.b16 %v34
  %v126 = vunpack.c.l.b16 %v35
  %v127 = vpack.c.b16 %v120, %v119
  %v128 = vpack.c.b16 %v122, %v121
  %v129 = vpack.c.b16 %v124, %v123
  %v130 = vpack.c.b16 %v126, %v125
  %vm135 = vcmask 523264
  %v137 = vsel %vm135, %v104, 0
  %139 = vmatprep.subr.bf16.mxu0 0
  %140 = vmatpush1.bf16.msra.mxu0 %v127
  %141 = vmatprep.subr.bf16.mxu0 0
  %142 = vmatpush1.bf16.msra.mxu0 %v128
  %143 = vmatprep.subr.bf16.mxu0 0
  %144 = vmatpush1.bf16.msra.mxu0 %v129
  %145 = vmatprep.subr.bf16.mxu0 0
  %146 = vmatpush1.bf16.msra.mxu0 %v130
  %147 = vmatprep.subr.bf16.mxu0 0
  %148 = vmatpush1.bf16.msra.mxu0 0
  %149 = vmatprep.subr.bf16.mxu0 0
  %150 = vmatpush1.bf16.msra.mxu0 0
  %151 = vmatprep.subr.bf16.mxu0 0
  %152 = vmatpush1.bf16.msra.mxu0 0
  %153 = vmatprep.subr.bf16.mxu0 0
  %154 = vmatpush1.bf16.msra.mxu0 0
  %155 = vmatprep.subr.bf16.mxu0 0
  %156 = vmatpush1.bf16.msra.mxu0 0
  %157 = vmatprep.subr.bf16.mxu0 0
  %158 = vmatpush1.bf16.msra.mxu0 0
  %159 = vmatprep.subr.bf16.mxu0 0
  %160 = vmatpush1.bf16.msra.mxu0 0
  %161 = vmatprep.subr.bf16.mxu0 0
  %162 = vmatpush1.bf16.msra.mxu0 0
  %163 = vmatprep.subr.bf16.mxu0 0
  %164 = vmatpush1.bf16.msra.mxu0 0
  %165 = vmatprep.subr.bf16.mxu0 0
  %166 = vmatpush1.bf16.msra.mxu0 0
  %167 = vmatprep.subr.bf16.mxu0 0
  %168 = vmatpush1.bf16.msra.mxu0 0
  %169 = vmatprep.subr.bf16.mxu0 0
  %170 = vmatpush1.bf16.msra.mxu0 0
  %171 = vmatprep.mubr.bf16.mxu0 0
  %172 = vmatmul.mubr.bf16.gmra.mrb[0].mxu0 %v137
  %v173 = vpop.f32.mrb[0].mxu0
  %v174 = vadd.f32 %v109, %v173
  %v175 = vpop.f32.mrb[0].mxu0
  %v176 = vpop.f32.mrb[0].mxu0
  %v177 = vpop.f32.mrb[0].mxu0
  %178 = vdwg.mxu0
  %v179 = vmax.f32 %v174, 0.0
  %v180 = vpack.c.bf16 %v179, %v179
  %v182 = vlaneseq
  %v183 = vshrl.u32 %v182, 7
  %v184 = vsub.s32 0, %v183
  %v185 = vrot.slane %v46, %v184
  %v195 = vunpack.c.l.b16 %v36
  %v196 = vunpack.c.l.b16 %v37
  %v197 = vunpack.c.l.b16 %v38
  %v198 = vunpack.c.l.b16 %v39
  %v199 = vunpack.c.l.b16 %v40
  %v200 = vunpack.c.l.b16 %v41
  %v201 = vunpack.c.l.b16 %v42
  %v202 = vunpack.c.l.b16 %v43
  %v203 = vpack.c.b16 %v196, %v195
  %v204 = vpack.c.b16 %v198, %v197
  %v205 = vpack.c.b16 %v200, %v199
  %v206 = vpack.c.b16 %v202, %v201
  %v212 = vsel %vm135, %v180, 0
  %214 = vmatprep.subr.bf16.mxu0 0
  %215 = vmatpush1.bf16.msra.mxu0 %v203
  %216 = vmatprep.subr.bf16.mxu0 0
  %217 = vmatpush1.bf16.msra.mxu0 %v204
  %218 = vmatprep.subr.bf16.mxu0 0
  %219 = vmatpush1.bf16.msra.mxu0 %v205
  %220 = vmatprep.subr.bf16.mxu0 0
  %221 = vmatpush1.bf16.msra.mxu0 %v206
  %222 = vmatprep.subr.bf16.mxu0 0
  %223 = vmatpush1.bf16.msra.mxu0 0
  %224 = vmatprep.subr.bf16.mxu0 0
  %225 = vmatpush1.bf16.msra.mxu0 0
  %226 = vmatprep.subr.bf16.mxu0 0
  %227 = vmatpush1.bf16.msra.mxu0 0
  %228 = vmatprep.subr.bf16.mxu0 0
  %229 = vmatpush1.bf16.msra.mxu0 0
  %230 = vmatprep.subr.bf16.mxu0 0
  %231 = vmatpush1.bf16.msra.mxu0 0
  %232 = vmatprep.subr.bf16.mxu0 0
  %233 = vmatpush1.bf16.msra.mxu0 0
  %234 = vmatprep.subr.bf16.mxu0 0
  %235 = vmatpush1.bf16.msra.mxu0 0
  %236 = vmatprep.subr.bf16.mxu0 0
  %237 = vmatpush1.bf16.msra.mxu0 0
  %238 = vmatprep.subr.bf16.mxu0 0
  %239 = vmatpush1.bf16.msra.mxu0 0
  %240 = vmatprep.subr.bf16.mxu0 0
  %241 = vmatpush1.bf16.msra.mxu0 0
  %242 = vmatprep.subr.bf16.mxu0 0
  %243 = vmatpush1.bf16.msra.mxu0 0
  %244 = vmatprep.subr.bf16.mxu0 0
  %245 = vmatpush1.bf16.msra.mxu0 0
  %246 = vmatprep.mubr.bf16.mxu0 0
  %247 = vmatmul.mubr.bf16.gmra.mrb[0].mxu0 %v212
  %v248 = vpop.f32.mrb[0].mxu0
  %v249 = vadd.f32 %v185, %v248
  %v250 = vpop.f32.mrb[0].mxu0
  %v251 = vpop.f32.mrb[0].mxu0
  %v252 = vpop.f32.mrb[0].mxu0
  %253 = vdwg.mxu0
  %vm254 = vcmask 31744
  %255 = vst.msk [vmem:[%s7] sm:$0xff] %vm254, %v249
  // Predicated region
  $region30: #{qnetwork_forward.1} parent=0 // pred_check
    _
  $region31: #{qnetwork_forward.1} parent=0 // pred_check_branch
    %257 = sbr.rel (0) target = $region33
  $region32: #{qnetwork_forward.1} parent=0 // pred_region
    _
  $region33: #{qnetwork_forward.1} parent=0 // pred_fallthru
    _
  // Predicated region
  $region34: #{qnetwork_forward.1} parent=0 // pred_check
    _
  $region35: #{qnetwork_forward.1} parent=0 // pred_check_branch
    %259 = sbr.rel (0) target = $region37
  $region36: #{qnetwork_forward.1} parent=0 // pred_region
    _
  $region37: #{qnetwork_forward.1} parent=0 // pred_fallthru
    _

</llo_original>
